<compile_context>
chip_gen: v5e
topology: v5e:2x2
jax: 0.10.0
libtpu: 0.0.40
codegen_flags: <defaults>
</compile_context>

<pallas_src>
import functools

import jax
import jax.numpy as jnp
from jax.experimental import pallas as pl
from jax.experimental.pallas import tpu as pltpu

HIDDEN = 32        # logical hidden_size (small test size; real model uses 256)
OUTPUT = 64        # logical output_size (vocab, small test size)
N_LAYERS = 1       # n_layers in the PyTorch module (shared GRU re-applied)

H_PAD = 128        # hidden padded to one full 128-lane vreg
O_PAD = 128        # vocab (logits) padded to one full 128-lane vreg
V_PAD = 128        # embedding-table rows padded (one-hot gather K dim)
NEG_BIG = -1e30    # bias on padded vocab columns -> exp() underflows to 0
CHUNK_MAX = 64     # decode steps folded into one grid iteration


def decoder_kernel(tok_ref,                                   # (CHUNK,1) int32 token ids
                   emb_ref, h0_ref,                           # resident table + initial hidden
                   w_ih_ref, w_hh_ref, b_ih_ref, b_hh_ref,    # packed GRU params (gates r,z,n)
                   w_out_ref, b_out_ref,                      # packed Linear params
                   logp_ref, h_out_ref,                       # outputs
                   h_scr, gi_scr, hrows_scr,                  # VMEM scratch
                   *, chunk, t_total):
    c = pl.program_id(0)

    @pl.when(c == 0)
    def _():
        h_scr[...] = h0_ref[...].astype(jnp.float32)

    # ---- embedding gather for the whole chunk via one-hot MXU matmul --------
    tok = tok_ref[...]                                             # (CHUNK, 1) int32
    onehot = (jax.lax.broadcasted_iota(jnp.int32, (chunk, V_PAD), 1)
              == tok).astype(jnp.float32)                          # (CHUNK, V_PAD)
    x = jnp.dot(onehot, emb_ref[...], preferred_element_type=jnp.float32)
    x = jnp.maximum(x, 0.0)                                        # F.relu(embedded)

    # ---- hoisted input->gates matmul for all steps of this chunk ------------
    gi_scr[...] = (jnp.dot(x, w_ih_ref[...], preferred_element_type=jnp.float32)
                   + b_ih_ref[...])                                # (CHUNK, 3*H_PAD)

    # Rows past the valid step count are never written by the loop; zero them
    # so the batched projection/log_softmax below stays finite.
    hrows_scr[...] = jnp.zeros_like(hrows_scr)

    w_hh = w_hh_ref[...]                                           # load once, reuse in loop
    b_hh = b_hh_ref[...]

    def gru_cell(gi, h):
        gh = jnp.dot(h, w_hh, preferred_element_type=jnp.float32) + b_hh
        r = jax.nn.sigmoid(gi[:, 0 * H_PAD:1 * H_PAD] + gh[:, 0 * H_PAD:1 * H_PAD])
        z = jax.nn.sigmoid(gi[:, 1 * H_PAD:2 * H_PAD] + gh[:, 1 * H_PAD:2 * H_PAD])
        n = jnp.tanh(gi[:, 2 * H_PAD:3 * H_PAD] + r * gh[:, 2 * H_PAD:3 * H_PAD])
        return (1.0 - z) * n + z * h        # new hidden == GRU output (seq=1)

    # Last chunk may be ragged: only run the valid steps (keeps hidden correct).
    n_valid = jnp.minimum(chunk, t_total - c * chunk)

    def step(i, h):
        h = gru_cell(gi_scr[pl.ds(i, 1), :], h)       # layer 0 uses hoisted gi
        for _ in range(N_LAYERS - 1):                 # extra layers re-apply same GRU
            xi = jnp.maximum(h, 0.0)
            gi = (jnp.dot(xi, w_ih_ref[...], preferred_element_type=jnp.float32)
                  + b_ih_ref[...])
            h = gru_cell(gi, h)
        hrows_scr[pl.ds(i, 1), :] = h                 # single h store per step
        return h

    h_final = jax.lax.fori_loop(0, n_valid, step, h_scr[...])
    h_scr[...] = h_final                              # carry to next chunk

    # ---- deferred output projection + log_softmax (whole chunk at once) -----
    # Padded vocab columns carry a -1e30 bias, so they vanish in the softmax.
    logits = (jnp.dot(hrows_scr[...], w_out_ref[...], preferred_element_type=jnp.float32)
              + b_out_ref[...])
    m = jnp.max(logits, axis=-1, keepdims=True)
    lse = m + jnp.log(jnp.sum(jnp.exp(logits - m), axis=-1, keepdims=True))
    logp_ref[...] = (logits - lse).astype(logp_ref.dtype)

    # Final hidden state: single writeback on the last chunk.
    @pl.when(c == pl.num_programs(0) - 1)
    def _():
        h_out_ref[...] = h_final.astype(h_out_ref.dtype)


def _pad2(x, rows, cols):
    return jnp.pad(x, ((0, rows - x.shape[0]), (0, cols - x.shape[1])))


def _round_up(x, m):
    return (x + m - 1) // m * m


def decoder_decode(tokens, hidden, emb, w_ih, w_hh, b_ih, b_hh, w_out, b_out):
    """Run T fused decode steps (T=1 is exactly the original forward).

    tokens : int32[T] token ids
    hidden : f32[1, 1, HIDDEN]
    emb    : f32[OUTPUT, HIDDEN]        (nn.Embedding weight)
    w_ih/w_hh : f32[3, HIDDEN, HIDDEN]  (GRU weight_ih/_hh transposed, gates r,z,n)
    b_ih/b_hh : f32[3, 1, HIDDEN]
    w_out  : f32[HIDDEN, OUTPUT]        (Linear weight^T), b_out: f32[1, OUTPUT]

    Returns (logp f32[T, OUTPUT], hidden f32[1, 1, HIDDEN]).
    """
    T = int(tokens.shape[0])
    chunk = min(CHUNK_MAX, _round_up(T, 8))   # multiple of 8 -> sublane-dense output
    t_pad = _round_up(T, chunk)
    n_chunks = t_pad // chunk

    # ---- lane-dense packing / zero-padding (once per launch, outside kernel) ----
    tok_p = jnp.zeros((t_pad, 1), jnp.int32).at[:T, 0].set(tokens.astype(jnp.int32))
    emb_p = _pad2(emb, V_PAD, H_PAD)                                    # (V_PAD, H_PAD)
    h0_p = _pad2(hidden.reshape(1, HIDDEN), 1, H_PAD)                   # (1, H_PAD)
    w_ih_p = jnp.concatenate([_pad2(w_ih[g], H_PAD, H_PAD) for g in range(3)], axis=1)
    w_hh_p = jnp.concatenate([_pad2(w_hh[g], H_PAD, H_PAD) for g in range(3)], axis=1)
    b_ih_p = jnp.concatenate([_pad2(b_ih[g], 1, H_PAD) for g in range(3)], axis=1)
    b_hh_p = jnp.concatenate([_pad2(b_hh[g], 1, H_PAD) for g in range(3)], axis=1)
    w_out_p = _pad2(w_out, H_PAD, O_PAD)
    b_out_p = jnp.full((1, O_PAD), NEG_BIG, jnp.float32).at[:, :OUTPUT].set(b_out)

    grid_spec = pltpu.PrefetchScalarGridSpec(
        num_scalar_prefetch=0,
        grid=(n_chunks,),
        in_specs=[
            pl.BlockSpec((chunk, 1), lambda c: (c, 0)),              # token ids per chunk
            pl.BlockSpec((V_PAD, H_PAD), lambda c: (0, 0)),          # embedding table (resident)
            pl.BlockSpec((1, H_PAD), lambda c: (0, 0)),              # hidden init
            pl.BlockSpec((H_PAD, 3 * H_PAD), lambda c: (0, 0)),      # W_ih packed
            pl.BlockSpec((H_PAD, 3 * H_PAD), lambda c: (0, 0)),      # W_hh packed
            pl.BlockSpec((1, 3 * H_PAD), lambda c: (0, 0)),          # b_ih packed
            pl.BlockSpec((1, 3 * H_PAD), lambda c: (0, 0)),          # b_hh packed
            pl.BlockSpec((H_PAD, O_PAD), lambda c: (0, 0)),          # W_out
            pl.BlockSpec((1, O_PAD), lambda c: (0, 0)),              # b_out (-1e30 vocab pad)
        ],
        out_specs=[
            pl.BlockSpec((chunk, O_PAD), lambda c: (c, 0)),          # per-chunk log-prob slab
            pl.BlockSpec((1, H_PAD), lambda c: (0, 0)),              # final hidden
        ],
        scratch_shapes=[
            pltpu.VMEM((1, H_PAD), jnp.float32),            # hidden carry
            pltpu.VMEM((chunk, 3 * H_PAD), jnp.float32),    # hoisted gi for the chunk
            pltpu.VMEM((chunk, H_PAD), jnp.float32),        # per-step hidden rows
        ],
    )

    kernel = functools.partial(decoder_kernel, chunk=chunk, t_total=T)

    logp_p, h_p = pl.pallas_call(
        kernel,
        out_shape=(jax.ShapeDtypeStruct((t_pad, O_PAD), jnp.float32),
                   jax.ShapeDtypeStruct((1, H_PAD), jnp.float32)),
        grid_spec=grid_spec,
        compiler_params=pltpu.CompilerParams(
            # Chunks carry the hidden state -> time axis must stay sequential.
            dimension_semantics=("arbitrary",)),
    )(tok_p, emb_p, h0_p, w_ih_p, w_hh_p, b_ih_p, b_hh_p, w_out_p, b_out_p)

    return logp_p[:T, :OUTPUT], h_p[:, :HIDDEN].reshape(1, 1, HIDDEN)


def reference(tokens, hidden, emb, w_ih, w_hh, b_ih, b_hh, w_out, b_out):
    """Pure-JAX loop of the original single-step PyTorch forward."""
    h = hidden.reshape(1, HIDDEN)
    logps = []
    for t in range(tokens.shape[0]):
        x = emb[tokens[t]][None, :]
        for _ in range(N_LAYERS):
            x = jnp.maximum(x, 0.0)
            gi = [x @ w_ih[k] + b_ih[k] for k in range(3)]
            gh = [h @ w_hh[k] + b_hh[k] for k in range(3)]
            r = jax.nn.sigmoid(gi[0] + gh[0])
            z = jax.nn.sigmoid(gi[1] + gh[1])
            n = jnp.tanh(gi[2] + r * gh[2])
            h = (1.0 - z) * n + z * h
            x = h
        logits = x @ w_out + b_out
        logps.append(jax.nn.log_softmax(logits, axis=-1))
    return jnp.concatenate(logps, axis=0), h.reshape(1, 1, HIDDEN)


if __name__ == "__main__":
    key = jax.random.PRNGKey(0)
    k = jax.random.split(key, 9)
    scale = 1.0 / float(jnp.sqrt(HIDDEN))

    # Deterministic parameter init (PyTorch-like distributions / shapes).
    emb   = jax.random.normal(k[0], (OUTPUT, HIDDEN), jnp.float32)                     # nn.Embedding
    w_ih  = jax.random.uniform(k[1], (3, HIDDEN, HIDDEN), jnp.float32, -scale, scale)  # GRU weight_ih^T
    w_hh  = jax.random.uniform(k[2], (3, HIDDEN, HIDDEN), jnp.float32, -scale, scale)  # GRU weight_hh^T
    b_ih  = jax.random.uniform(k[3], (3, 1, HIDDEN), jnp.float32, -scale, scale)
    b_hh  = jax.random.uniform(k[4], (3, 1, HIDDEN), jnp.float32, -scale, scale)
    w_out = jax.random.uniform(k[5], (HIDDEN, OUTPUT), jnp.float32, -scale, scale)     # Linear weight^T
    b_out = jax.random.uniform(k[6], (1, OUTPUT), jnp.float32, -scale, scale)

    T = 8
    tokens = jax.random.randint(k[7], (T,), 0, OUTPUT, jnp.int32)       # decode-step token ids
    hidden = jax.random.normal(k[8], (1, 1, HIDDEN), jnp.float32)       # (n_layers, batch, H)

    logp, h_new = decoder_decode(tokens, hidden, emb, w_ih, w_hh, b_ih, b_hh, w_out, b_out)
    jax.block_until_ready((logp, h_new))

    ref_logp, ref_h = reference(tokens, hidden, emb, w_ih, w_hh, b_ih, b_hh, w_out, b_out)
    assert jnp.allclose(logp, ref_logp, atol=1e-5), "log-prob mismatch"
    assert jnp.allclose(h_new, ref_h, atol=1e-5), "hidden mismatch"

    print("KERNEL_OK")
</pallas_src>

<mosaic_0001>
module attributes {stable_mosaic.version = 11 : i64} {
  func.func @decoder_kernel(%arg0: i32, %arg1: memref<8x1xi32, #tpu.memory_space<vmem>>, %arg2: memref<128x128xf32, #tpu.memory_space<vmem>>, %arg3: memref<1x128xf32, #tpu.memory_space<vmem>>, %arg4: memref<128x384xf32, #tpu.memory_space<vmem>>, %arg5: memref<128x384xf32, #tpu.memory_space<vmem>>, %arg6: memref<1x384xf32, #tpu.memory_space<vmem>>, %arg7: memref<1x384xf32, #tpu.memory_space<vmem>>, %arg8: memref<128x128xf32, #tpu.memory_space<vmem>>, %arg9: memref<1x128xf32, #tpu.memory_space<vmem>>, %arg10: memref<8x128xf32, #tpu.memory_space<vmem>>, %arg11: memref<1x128xf32, #tpu.memory_space<vmem>>, %arg12: memref<1x128xf32, #tpu.memory_space<vmem>>, %arg13: memref<8x384xf32, #tpu.memory_space<vmem>>, %arg14: memref<8x128xf32, #tpu.memory_space<vmem>>) attributes {dimension_semantics = [#tpu.dimension_semantics<arbitrary>], iteration_bounds = array<i64: 1>, scalar_prefetch = 0 : i64, scratch_operands = 3 : i64, tpu.core_type = #tpu.core_type<tc>, window_params = [{transform_indices = @transform_0, window_bounds = array<i64: 8, 1>}, {pipeline_mode = #tpu.pipeline_mode<synchronous>, transform_indices = @transform_1, window_bounds = array<i64: 128, 128>}, {pipeline_mode = #tpu.pipeline_mode<synchronous>, transform_indices = @transform_2, window_bounds = array<i64: 1, 128>}, {pipeline_mode = #tpu.pipeline_mode<synchronous>, transform_indices = @transform_3, window_bounds = array<i64: 128, 384>}, {pipeline_mode = #tpu.pipeline_mode<synchronous>, transform_indices = @transform_4, window_bounds = array<i64: 128, 384>}, {pipeline_mode = #tpu.pipeline_mode<synchronous>, transform_indices = @transform_5, window_bounds = array<i64: 1, 384>}, {pipeline_mode = #tpu.pipeline_mode<synchronous>, transform_indices = @transform_6, window_bounds = array<i64: 1, 384>}, {pipeline_mode = #tpu.pipeline_mode<synchronous>, transform_indices = @transform_7, window_bounds = array<i64: 128, 128>}, {pipeline_mode = #tpu.pipeline_mode<synchronous>, transform_indices = @transform_8, window_bounds = array<i64: 1, 128>}, {transform_indices = @transform_9, window_bounds = array<i64: 8, 128>}, {pipeline_mode = #tpu.pipeline_mode<synchronous>, transform_indices = @transform_10, window_bounds = array<i64: 1, 128>}]} {
    %c0_i32 = arith.constant 0 : i32
    %0 = arith.cmpi eq, %arg0, %c0_i32 : i32
    %1 = arith.extui %0 : i1 to i32
    %c0_i32_0 = arith.constant 0 : i32
    %2 = arith.cmpi ne, %1, %c0_i32_0 : i32
    scf.if %2 {
      %c0_39 = arith.constant 0 : index
      %c0_40 = arith.constant 0 : index
      %52 = vector.load %arg3[%c0_39, %c0_40] : memref<1x128xf32, #tpu.memory_space<vmem>>, vector<1x128xf32>
      %c0_41 = arith.constant 0 : index
      %c0_42 = arith.constant 0 : index
      %53 = vector.load %arg12[%c0_41, %c0_42] : memref<1x128xf32, #tpu.memory_space<vmem>>, vector<1x128xf32>
      tpu.vector_store %arg12[%c0_41, %c0_42], %52 {strides = array<i32>} : memref<1x128xf32, #tpu.memory_space<vmem>>, vector<1x128xf32>,
    } else {
    }
    %c0 = arith.constant 0 : index
    %c0_1 = arith.constant 0 : index
    %3 = vector.load %arg1[%c0, %c0_1] : memref<8x1xi32, #tpu.memory_space<vmem>>, vector<8x1xi32>
    %4 = tpu.iota {dimensions = array<i32: 1>} : vector<8x128xi32>
    %5 = vector.broadcast %3 : vector<8x1xi32> to vector<8x128xi32>
    %6 = arith.cmpi eq, %4, %5 : vector<8x128xi32>
    %7 = arith.extui %6 : vector<8x128xi1> to vector<8x128xi32>
    %8 = arith.sitofp %7 : vector<8x128xi32> to vector<8x128xf32>
    %c0_2 = arith.constant 0 : index
    %c0_3 = arith.constant 0 : index
    %9 = vector.load %arg2[%c0_2, %c0_3] : memref<128x128xf32, #tpu.memory_space<vmem>>, vector<128x128xf32>
    %cst = arith.constant dense<0.000000e+00> : vector<8x128xf32>
    %10 = tpu.matmul %8, %9, %cst {dimension_numbers = #tpu.dot_dimension_numbers<[1], [0], [0], [1], [0, 0, 1, 1], [], []>} : vector<8x128xf32>, vector<128x128xf32>, vector<8x128xf32> -> vector<8x128xf32>
    %cst_4 = arith.constant 0.000000e+00 : f32
    %11 = vector.broadcast %cst_4 : f32 to vector<8x128xf32>
    %12 = arith.maximumf %10, %11 : vector<8x128xf32>
    %c0_5 = arith.constant 0 : index
    %c0_6 = arith.constant 0 : index
    %13 = vector.load %arg4[%c0_5, %c0_6] : memref<128x384xf32, #tpu.memory_space<vmem>>, vector<128x384xf32>
    %cst_7 = arith.constant dense<0.000000e+00> : vector<8x384xf32>
    %14 = tpu.matmul %12, %13, %cst_7 {dimension_numbers = #tpu.dot_dimension_numbers<[1], [0], [0], [1], [0, 0, 1, 1], [], []>} : vector<8x128xf32>, vector<128x384xf32>, vector<8x384xf32> -> vector<8x384xf32>
    %c0_8 = arith.constant 0 : index
    %c0_9 = arith.constant 0 : index
    %15 = vector.load %arg6[%c0_8, %c0_9] : memref<1x384xf32, #tpu.memory_space<vmem>>, vector<1x384xf32>
    %16 = vector.broadcast %15 : vector<1x384xf32> to vector<8x384xf32>
    %17 = arith.addf %14, %16 : vector<8x384xf32>
    %c0_10 = arith.constant 0 : index
    %c0_11 = arith.constant 0 : index
    %18 = vector.load %arg13[%c0_10, %c0_11] : memref<8x384xf32, #tpu.memory_space<vmem>>, vector<8x384xf32>
    tpu.vector_store %arg13[%c0_10, %c0_11], %17 {strides = array<i32>} : memref<8x384xf32, #tpu.memory_space<vmem>>, vector<8x384xf32>,
    %cst_12 = arith.constant 0.000000e+00 : f32
    %19 = vector.broadcast %cst_12 : f32 to vector<8x128xf32>
    %c0_13 = arith.constant 0 : index
    %c0_14 = arith.constant 0 : index
    %20 = vector.load %arg14[%c0_13, %c0_14] : memref<8x128xf32, #tpu.memory_space<vmem>>, vector<8x128xf32>
    tpu.vector_store %arg14[%c0_13, %c0_14], %19 {strides = array<i32>} : memref<8x128xf32, #tpu.memory_space<vmem>>, vector<8x128xf32>,
    %c0_15 = arith.constant 0 : index
    %c0_16 = arith.constant 0 : index
    %21 = vector.load %arg5[%c0_15, %c0_16] : memref<128x384xf32, #tpu.memory_space<vmem>>, vector<128x384xf32>
    %c0_17 = arith.constant 0 : index
    %c0_18 = arith.constant 0 : index
    %22 = vector.load %arg7[%c0_17, %c0_18] : memref<1x384xf32, #tpu.memory_space<vmem>>, vector<1x384xf32>
    %c8_i32 = arith.constant 8 : i32
    %23 = arith.muli %arg0, %c8_i32 : i32
    %c8_i32_19 = arith.constant 8 : i32
    %24 = arith.subi %c8_i32_19, %23 : i32
    %c8_i32_20 = arith.constant 8 : i32
    %25 = arith.minsi %c8_i32_20, %24 : i32
    %c0_21 = arith.constant 0 : index
    %c0_22 = arith.constant 0 : index
    %26 = vector.load %arg12[%c0_21, %c0_22] : memref<1x128xf32, #tpu.memory_space<vmem>>, vector<1x128xf32>
    %c0_i32_23 = arith.constant 0 : i32
    %27 = arith.subi %25, %c0_i32_23 : i32
    %28 = arith.addi %c0_i32_23, %27 : i32
    %c1_i32 = arith.constant 1 : i32
    %29 = scf.for %arg15 = %c0_i32_23 to %28 step %c1_i32 iter_args(%arg16 = %26) -> (vector<1x128xf32>)  : i32 {
      %52 = arith.index_cast %arg15 : i32 to index
      %c0_39 = arith.constant 0 : index
      %53 = vector.load %arg13[%52, %c0_39] : memref<8x384xf32, #tpu.memory_space<vmem>>, vector<1x384xf32>
      %cst_40 = arith.constant dense<0.000000e+00> : vector<1x384xf32>
      %54 = tpu.matmul %arg16, %21, %cst_40 {dimension_numbers = #tpu.dot_dimension_numbers<[1], [0], [0], [1], [0, 0, 1, 1], [], []>} : vector<1x128xf32>, vector<128x384xf32>, vector<1x384xf32> -> vector<1x384xf32>
      %55 = arith.addf %54, %22 : vector<1x384xf32>
      %56 = vector.extract_strided_slice %53 {offsets = [0, 0], sizes = [1, 128], strides = [1, 1]} : vector<1x384xf32> to vector<1x128xf32>
      %57 = vector.extract_strided_slice %55 {offsets = [0, 0], sizes = [1, 128], strides = [1, 1]} : vector<1x384xf32> to vector<1x128xf32>
      %58 = arith.addf %56, %57 : vector<1x128xf32>
      %59 = arith.negf %58 : vector<1x128xf32>
      %60 = math.exp %59 : vector<1x128xf32>
      %cst_41 = arith.constant 1.000000e+00 : f32
      %61 = vector.broadcast %cst_41 : f32 to vector<1x128xf32>
      %62 = arith.addf %61, %60 : vector<1x128xf32>
      %63 = arith.divf %61, %62 : vector<1x128xf32>
      %64 = vector.extract_strided_slice %53 {offsets = [0, 128], sizes = [1, 128], strides = [1, 1]} : vector<1x384xf32> to vector<1x128xf32>
      %65 = vector.extract_strided_slice %55 {offsets = [0, 128], sizes = [1, 128], strides = [1, 1]} : vector<1x384xf32> to vector<1x128xf32>
      %66 = arith.addf %64, %65 : vector<1x128xf32>
      %67 = arith.negf %66 : vector<1x128xf32>
      %68 = math.exp %67 : vector<1x128xf32>
      %cst_42 = arith.constant 1.000000e+00 : f32
      %69 = vector.broadcast %cst_42 : f32 to vector<1x128xf32>
      %70 = arith.addf %69, %68 : vector<1x128xf32>
      %71 = arith.divf %69, %70 : vector<1x128xf32>
      %72 = vector.extract_strided_slice %53 {offsets = [0, 256], sizes = [1, 128], strides = [1, 1]} : vector<1x384xf32> to vector<1x128xf32>
      %73 = vector.extract_strided_slice %55 {offsets = [0, 256], sizes = [1, 128], strides = [1, 1]} : vector<1x384xf32> to vector<1x128xf32>
      %74 = arith.mulf %63, %73 : vector<1x128xf32>
      %75 = arith.addf %72, %74 : vector<1x128xf32>
      %76 = math.tanh %75 : vector<1x128xf32>
      %cst_43 = arith.constant 1.000000e+00 : f32
      %77 = vector.broadcast %cst_43 : f32 to vector<1x128xf32>
      %78 = arith.subf %77, %71 : vector<1x128xf32>
      %79 = arith.mulf %78, %76 : vector<1x128xf32>
      %80 = arith.mulf %71, %arg16 : vector<1x128xf32>
      %81 = arith.addf %79, %80 : vector<1x128xf32>
      %82 = arith.index_cast %arg15 : i32 to index
      %c0_44 = arith.constant 0 : index
      %83 = vector.load %arg14[%82, %c0_44] : memref<8x128xf32, #tpu.memory_space<vmem>>, vector<1x128xf32>
      tpu.vector_store %arg14[%82, %c0_44], %81 {strides = array<i32>} : memref<8x128xf32, #tpu.memory_space<vmem>>, vector<1x128xf32>,
      scf.yield %81 : vector<1x128xf32>
    }
    %c0_24 = arith.constant 0 : index
    %c0_25 = arith.constant 0 : index
    %30 = vector.load %arg12[%c0_24, %c0_25] : memref<1x128xf32, #tpu.memory_space<vmem>>, vector<1x128xf32>
    tpu.vector_store %arg12[%c0_24, %c0_25], %29 {strides = array<i32>} : memref<1x128xf32, #tpu.memory_space<vmem>>, vector<1x128xf32>,
    %c0_26 = arith.constant 0 : index
    %c0_27 = arith.constant 0 : index
    %31 = vector.load %arg14[%c0_26, %c0_27] : memref<8x128xf32, #tpu.memory_space<vmem>>, vector<8x128xf32>
    %c0_28 = arith.constant 0 : index
    %c0_29 = arith.constant 0 : index
    %32 = vector.load %arg8[%c0_28, %c0_29] : memref<128x128xf32, #tpu.memory_space<vmem>>, vector<128x128xf32>
    %cst_30 = arith.constant dense<0.000000e+00> : vector<8x128xf32>
    %33 = tpu.matmul %31, %32, %cst_30 {dimension_numbers = #tpu.dot_dimension_numbers<[1], [0], [0], [1], [0, 0, 1, 1], [], []>} : vector<8x128xf32>, vector<128x128xf32>, vector<8x128xf32> -> vector<8x128xf32>
    %c0_31 = arith.constant 0 : index
    %c0_32 = arith.constant 0 : index
    %34 = vector.load %arg9[%c0_31, %c0_32] : memref<1x128xf32, #tpu.memory_space<vmem>>, vector<1x128xf32>
    %35 = vector.broadcast %34 : vector<1x128xf32> to vector<8x128xf32>
    %36 = arith.addf %33, %35 : vector<8x128xf32>
    %cst_33 = arith.constant dense<0xFF800000> : vector<8xf32>
    %37 = vector.multi_reduction <maximumf>, %36, %cst_33 [1] : vector<8x128xf32> to vector<8xf32>
    %38 = vector.shape_cast %37 : vector<8xf32> to vector<8x1xf32>
    %39 = vector.broadcast %38 : vector<8x1xf32> to vector<8x128xf32>
    %40 = arith.subf %36, %39 : vector<8x128xf32>
    %41 = math.exp %40 : vector<8x128xf32>
    %cst_34 = arith.constant dense<0.000000e+00> : vector<8xf32>
    %42 = vector.multi_reduction <add>, %41, %cst_34 [1] : vector<8x128xf32> to vector<8xf32>
    %43 = vector.shape_cast %42 : vector<8xf32> to vector<8x1xf32>
    %44 = math.log %43 : vector<8x1xf32>
    %45 = arith.addf %38, %44 : vector<8x1xf32>
    %46 = vector.broadcast %45 : vector<8x1xf32> to vector<8x128xf32>
    %47 = arith.subf %36, %46 : vector<8x128xf32>
    %c0_35 = arith.constant 0 : index
    %c0_36 = arith.constant 0 : index
    %48 = vector.load %arg10[%c0_35, %c0_36] : memref<8x128xf32, #tpu.memory_space<vmem>>, vector<8x128xf32>
    tpu.vector_store %arg10[%c0_35, %c0_36], %47 {strides = array<i32>} : memref<8x128xf32, #tpu.memory_space<vmem>>, vector<8x128xf32>,
    %c0_i32_37 = arith.constant 0 : i32
    %49 = arith.cmpi eq, %arg0, %c0_i32_37 : i32
    %50 = arith.extui %49 : i1 to i32
    %c0_i32_38 = arith.constant 0 : i32
    %51 = arith.cmpi ne, %50, %c0_i32_38 : i32
    scf.if %51 {
      %c0_39 = arith.constant 0 : index
      %c0_40 = arith.constant 0 : index
      %52 = vector.load %arg11[%c0_39, %c0_40] : memref<1x128xf32, #tpu.memory_space<vmem>>, vector<1x128xf32>
      tpu.vector_store %arg11[%c0_39, %c0_40], %29 {strides = array<i32>} : memref<1x128xf32, #tpu.memory_space<vmem>>, vector<1x128xf32>,
    } else {
    }
    return
  }
  func.func @transform_0(%arg0: i32) -> (i32, i32) {
    %c0_i32 = arith.constant 0 : i32
    %c0_i32_0 = arith.constant 0 : i32
    return %arg0, %c0_i32 : i32, i32
  }
  func.func @transform_1(%arg0: i32) -> (i32, i32) {
    %c0_i32 = arith.constant 0 : i32
    %c0_i32_0 = arith.constant 0 : i32
    %c0_i32_1 = arith.constant 0 : i32
    return %c0_i32, %c0_i32_0 : i32, i32
  }
  func.func @transform_2(%arg0: i32) -> (i32, i32) {
    %c0_i32 = arith.constant 0 : i32
    %c0_i32_0 = arith.constant 0 : i32
    %c0_i32_1 = arith.constant 0 : i32
    return %c0_i32, %c0_i32_0 : i32, i32
  }
  func.func @transform_3(%arg0: i32) -> (i32, i32) {
    %c0_i32 = arith.constant 0 : i32
    %c0_i32_0 = arith.constant 0 : i32
    %c0_i32_1 = arith.constant 0 : i32
    return %c0_i32, %c0_i32_0 : i32, i32
  }
  func.func @transform_4(%arg0: i32) -> (i32, i32) {
    %c0_i32 = arith.constant 0 : i32
    %c0_i32_0 = arith.constant 0 : i32
    %c0_i32_1 = arith.constant 0 : i32
    return %c0_i32, %c0_i32_0 : i32, i32
  }
  func.func @transform_5(%arg0: i32) -> (i32, i32) {
    %c0_i32 = arith.constant 0 : i32
    %c0_i32_0 = arith.constant 0 : i32
    %c0_i32_1 = arith.constant 0 : i32
    return %c0_i32, %c0_i32_0 : i32, i32
  }
  func.func @transform_6(%arg0: i32) -> (i32, i32) {
    %c0_i32 = arith.constant 0 : i32
    %c0_i32_0 = arith.constant 0 : i32
    %c0_i32_1 = arith.constant 0 : i32
    return %c0_i32, %c0_i32_0 : i32, i32
  }
  func.func @transform_7(%arg0: i32) -> (i32, i32) {
    %c0_i32 = arith.constant 0 : i32
    %c0_i32_0 = arith.constant 0 : i32
    %c0_i32_1 = arith.constant 0 : i32
    return %c0_i32, %c0_i32_0 : i32, i32
  }
  func.func @transform_8(%arg0: i32) -> (i32, i32) {
    %c0_i32 = arith.constant 0 : i32
    %c0_i32_0 = arith.constant 0 : i32
    %c0_i32_1 = arith.constant 0 : i32
    return %c0_i32, %c0_i32_0 : i32, i32
  }
  func.func @transform_9(%arg0: i32) -> (i32, i32) {
    %c0_i32 = arith.constant 0 : i32
    %c0_i32_0 = arith.constant 0 : i32
    return %arg0, %c0_i32 : i32, i32
  }
  func.func @transform_10(%arg0: i32) -> (i32, i32) {
    %c0_i32 = arith.constant 0 : i32
    %c0_i32_0 = arith.constant 0 : i32
    %c0_i32_1 = arith.constant 0 : i32
    return %c0_i32, %c0_i32_0 : i32, i32
  }
}

</mosaic_0001>

<llo_original>
// kernel: tpu_custom_call.1
$region0: #{tpu_custom_call.1}
  #allocation0 [shape = 'u32[]', space=smem, size = 0x4, offset = 0x4, fixed_abs, tag = 'smem constant byte address 0x4 - core index']
  #allocation1 [shape = 'u32[72,128]{1,0:T(1,128)}', space=vmem, size = 0x9000, scoped, tag = 'internal scratch']
  #allocation2 [shape = 'f32[1,128]{1,0:T(1,128)}', space=vmem, size = 0x200, scoped, tag = 'scratch operand']
  #allocation3 [shape = 'f32[8,384]{1,0:T(8,128)}', space=vmem, size = 0x3000, scoped, tag = 'scratch operand']
  #allocation4 [shape = 'f32[8,128]{1,0:T(8,128)}', space=vmem, size = 0x1000, scoped, tag = 'scratch operand']
  %s0 = inlined_call_operand.vmem [shape: s32[8,1], index: 0, kind: input, shape index: {}]
  %s1 = inlined_call_operand.hbm [shape: f32[128,128], index: 1, kind: input, shape index: {}]
  %s2 = inlined_call_operand.vmem [shape: f32[1,128], index: 2, kind: input, shape index: {}]
  %s3 = inlined_call_operand.hbm [shape: f32[128,384], index: 3, kind: input, shape index: {}]
  %s4 = inlined_call_operand.hbm [shape: f32[128,384], index: 4, kind: input, shape index: {}]
  %s5 = inlined_call_operand.vmem [shape: f32[1,384], index: 5, kind: input, shape index: {}]
  %s6 = inlined_call_operand.vmem [shape: f32[1,384], index: 6, kind: input, shape index: {}]
  %s7 = inlined_call_operand.hbm [shape: f32[128,128], index: 7, kind: input, shape index: {}]
  %s8 = inlined_call_operand.vmem [shape: f32[1,128], index: 8, kind: input, shape index: {}]
  %s9 = inlined_call_operand.hbm [shape: f32[8,128], index: 9, kind: output, shape index: {0}]
  %s10 = inlined_call_operand.hbm [shape: f32[1,128], index: 10, kind: output, shape index: {1}]
  %11 = xla_tuple %s9, %s10
  %s12 = sld [smem:[#allocation0]]
  $region85: #{tpu_custom_call.1} parent=0
    _
  %s14 = ssub.s32 1, %s12
  %s15 = scalar_select 0, %s14, %s12
  $region1: #{tpu_custom_call.1} parent=0
    #allocation5 [shape = 'u8[65536]{0}', space=vmem, size = 0x10000, scoped, tag = 'input window, operand 1, single buffered']
    #allocation6 [shape = 's32[1]{0}', space=sflag, size = 0x4, scoped, tag = 'scoped memory for tpu_custom_call.1']
    #allocation7 [shape = 's32[1]{0}', space=sflag, size = 0x4, scoped, tag = 'scoped memory for tpu_custom_call.1']
    #allocation8 [shape = 'u8[196608]{0}', space=vmem, size = 0x30000, scoped, tag = 'input window, operand 3, single buffered']
    #allocation9 [shape = 's32[1]{0}', space=sflag, size = 0x4, scoped, tag = 'scoped memory for tpu_custom_call.1']
    #allocation10 [shape = 'u8[196608]{0}', space=vmem, size = 0x30000, scoped, tag = 'input window, operand 4, single buffered']
    #allocation11 [shape = 'u8[65536]{0}', space=vmem, size = 0x10000, scoped, tag = 'input window, operand 7, single buffered']
    #allocation12 [shape = 's32[1]{0}', space=sflag, size = 0x4, scoped, tag = 'scoped memory for tpu_custom_call.1']
    #allocation13 [shape = 'u8[4096]{0}', space=vmem, size = 0x1000, scoped, tag = 'output window, operand 0, single buffered']
    #allocation14 [shape = 'u8[512]{0}', space=vmem, size = 0x400, scoped, tag = 'output window, operand 1, single buffered']
    #allocation15 [shape = 's32[1]{0}', space=sflag, size = 0x4, scoped, tag = 'scoped memory for tpu_custom_call.1']
    %16 = vsyncpa [#allocation6], 0
    %17 = vsyncpa [#allocation9], 0
    %18 = vsyncpa [#allocation12], 0
    %19 = vsyncpa [#allocation7], 0
    %20 = vsyncpa [#allocation15], 0
    // Predicated region
    $region2: #{tpu_custom_call.1} parent=1 // pred_check
      _
    $region3: #{tpu_custom_call.1} parent=1 // pred_check_branch
      %22 = sbr.rel (0) target = $region5
    $region4: #{tpu_custom_call.1} parent=1 // pred_region
      _
    $region5: #{tpu_custom_call.1} parent=1 // pred_fallthru
      _
    // Predicated region
    $region6: #{tpu_custom_call.1} parent=1 // pred_check
      _
    $region7: #{tpu_custom_call.1} parent=1 // pred_check_branch
      %24 = sbr.rel (0) target = $region9
    $region8: #{tpu_custom_call.1} parent=1 // pred_region
      %26 = vsyncadd [#allocation6], 0
      %s27 = sshll.u32 %s1, 4
      %s28 = int_to_ptr.hbm [resolvable:$true] %s27
      %s29 = sshll.u32 [#allocation5], 4
      %s30 = int_to_ptr.vmem [resolvable:$true] %s29
      %35 = dma.hbm_to_vmem [thread:$0]  %s28, 2048, %s30, [#allocation6], 128, 128, 8
    $region9: #{tpu_custom_call.1} parent=1 // pred_fallthru
      _
    // Predicated region
    $region10: #{tpu_custom_call.1} parent=1 // pred_check
      _
    $region11: #{tpu_custom_call.1} parent=1 // pred_check_branch
      %37 = sbr.rel (0) target = $region13
    $region12: #{tpu_custom_call.1} parent=1 // pred_region
      _
    $region13: #{tpu_custom_call.1} parent=1 // pred_fallthru
      _
    // Predicated region
    $region14: #{tpu_custom_call.1} parent=1 // pred_check
      _
    $region15: #{tpu_custom_call.1} parent=1 // pred_check_branch
      %39 = sbr.rel (0) target = $region17
    $region16: #{tpu_custom_call.1} parent=1 // pred_region
      %41 = vsyncadd [#allocation9], 0
      %s42 = sshll.u32 %s3, 4
      %s43 = int_to_ptr.hbm [resolvable:$true] %s42
      %s44 = sshll.u32 [#allocation8], 4
      %s45 = int_to_ptr.vmem [resolvable:$true] %s44
      %50 = dma.hbm_to_vmem [thread:$0]  %s43, 6144, %s45, [#allocation9], 384, 384, 24
    $region17: #{tpu_custom_call.1} parent=1 // pred_fallthru
      _
    // Predicated region
    $region18: #{tpu_custom_call.1} parent=1 // pred_check
      _
    $region19: #{tpu_custom_call.1} parent=1 // pred_check_branch
      %52 = sbr.rel (0) target = $region21
    $region20: #{tpu_custom_call.1} parent=1 // pred_region
      %54 = vsyncadd [#allocation9], 0
      %s55 = sshll.u32 %s4, 4
      %s56 = int_to_ptr.hbm [resolvable:$true] %s55
      %s57 = sshll.u32 [#allocation10], 4
      %s58 = int_to_ptr.vmem [resolvable:$true] %s57
      %63 = dma.hbm_to_vmem [thread:$0]  %s56, 6144, %s58, [#allocation9], 384, 384, 24
    $region21: #{tpu_custom_call.1} parent=1 // pred_fallthru
      _
    // Predicated region
    $region22: #{tpu_custom_call.1} parent=1 // pred_check
      _
    $region23: #{tpu_custom_call.1} parent=1 // pred_check_branch
      %65 = sbr.rel (0) target = $region25
    $region24: #{tpu_custom_call.1} parent=1 // pred_region
      _
    $region25: #{tpu_custom_call.1} parent=1 // pred_fallthru
      _
    // Predicated region
    $region26: #{tpu_custom_call.1} parent=1 // pred_check
      _
    $region27: #{tpu_custom_call.1} parent=1 // pred_check_branch
      %67 = sbr.rel (0) target = $region29
    $region28: #{tpu_custom_call.1} parent=1 // pred_region
      _
    $region29: #{tpu_custom_call.1} parent=1 // pred_fallthru
      _
    // Predicated region
    $region30: #{tpu_custom_call.1} parent=1 // pred_check
      _
    $region31: #{tpu_custom_call.1} parent=1 // pred_check_branch
      %69 = sbr.rel (0) target = $region33
    $region32: #{tpu_custom_call.1} parent=1 // pred_region
      %71 = vsyncadd [#allocation12], 0
      %s72 = sshll.u32 %s7, 4
      %s73 = int_to_ptr.hbm [resolvable:$true] %s72
      %s74 = sshll.u32 [#allocation11], 4
      %s75 = int_to_ptr.vmem [resolvable:$true] %s74
      %80 = dma.hbm_to_vmem [thread:$0]  %s73, 2048, %s75, [#allocation12], 128, 128, 8
    $region33: #{tpu_custom_call.1} parent=1 // pred_fallthru
      _
    // Predicated region
    $region34: #{tpu_custom_call.1} parent=1 // pred_check
      _
    $region35: #{tpu_custom_call.1} parent=1 // pred_check_branch
      %82 = sbr.rel (0) target = $region37
    $region36: #{tpu_custom_call.1} parent=1 // pred_region
      _
    $region37: #{tpu_custom_call.1} parent=1 // pred_fallthru
      _
    // Predicated region
    $region38: #{tpu_custom_call.1} parent=1 // pred_check
      _
    $region39: #{tpu_custom_call.1} parent=1 // pred_check_branch
      %84 = sbr.rel (0) target = $region41
    $region40: #{tpu_custom_call.1} parent=1 // pred_region
      %86 = dma.done [#allocation6], 2048
    $region41: #{tpu_custom_call.1} parent=1 // pred_fallthru
      _
    // Predicated region
    $region42: #{tpu_custom_call.1} parent=1 // pred_check
      _
    $region43: #{tpu_custom_call.1} parent=1 // pred_check_branch
      %88 = sbr.rel (0) target = $region45
    $region44: #{tpu_custom_call.1} parent=1 // pred_region
      %90 = dma.done [#allocation9], 6144
    $region45: #{tpu_custom_call.1} parent=1 // pred_fallthru
      _
    // Predicated region
    $region46: #{tpu_custom_call.1} parent=1 // pred_check
      _
    $region47: #{tpu_custom_call.1} parent=1 // pred_check_branch
      %92 = sbr.rel (0) target = $region49
    $region48: #{tpu_custom_call.1} parent=1 // pred_region
      %94 = dma.done [#allocation9], 6144
    $region49: #{tpu_custom_call.1} parent=1 // pred_fallthru
      _
    // Predicated region
    $region50: #{tpu_custom_call.1} parent=1 // pred_check
      _
    $region51: #{tpu_custom_call.1} parent=1 // pred_check_branch
      %96 = sbr.rel (0) target = $region53
    $region52: #{tpu_custom_call.1} parent=1 // pred_region
      %98 = dma.done [#allocation12], 2048
    $region53: #{tpu_custom_call.1} parent=1 // pred_fallthru
      _
    %p99 = scmp.eq.s32.totalorder 0, 0
    // Predicated region
    $region54: #{tpu_custom_call.1} parent=1 // pred_check
      %p100 = pneg %p99
    $region55: #{tpu_custom_call.1} parent=1 // pred_check_branch
      %102 = sbr.rel (%p100) target = $region57
    $region56: #{tpu_custom_call.1} parent=1 // pred_region
      %v103 = vld [vmem:[%s2] sm:$0x1]
      %104 = vst [vmem:[#allocation2] sm:$0x1] %v103
    $region57: #{tpu_custom_call.1} parent=1 // pred_fallthru
      _
    %v105 = vld [vmem:[%s0] sm:$0xff]
    %v106 = vlaneseq
    %v107 = vand.u32 %v106, 127
    %108 = vset.pattern.permute.xlu0 0
    %109 = vperm.xlu0 %108, %v105
    %v110 = vpop.permute.xlu0 %109
    %vm111 = vcmp.eq.s32.totalorder %v107, %v110
    %v112 = vsel %vm111, 1, 0
    %v113 = vcvt.s32.f32 %v112
    %v114 = vld [vmem:[#allocation5] sm:$0xff]
    %v115 = vld [vmem:[#allocation5 + $0x8] sm:$0xff]
    %v116 = vld [vmem:[#allocation5 + $0x10] sm:$0xff]
    %v117 = vld [vmem:[#allocation5 + $0x18] sm:$0xff]
    %v118 = vld [vmem:[#allocation5 + $0x20] sm:$0xff]
    %v119 = vld [vmem:[#allocation5 + $0x28] sm:$0xff]
    %v120 = vld [vmem:[#allocation5 + $0x30] sm:$0xff]
    %v121 = vld [vmem:[#allocation5 + $0x38] sm:$0xff]
    %v122 = vld [vmem:[#allocation5 + $0x40] sm:$0xff]
    %v123 = vld [vmem:[#allocation5 + $0x48] sm:$0xff]
    %v124 = vld [vmem:[#allocation5 + $0x50] sm:$0xff]
    %v125 = vld [vmem:[#allocation5 + $0x58] sm:$0xff]
    %v126 = vld [vmem:[#allocation5 + $0x60] sm:$0xff]
    %v127 = vld [vmem:[#allocation5 + $0x68] sm:$0xff]
    %v128 = vld [vmem:[#allocation5 + $0x70] sm:$0xff]
    %v129 = vld [vmem:[#allocation5 + $0x78] sm:$0xff]
    %130 = vmatpush.msra.mxu0 %v129
    %131 = vmatpush.msra.mxu0 %v128
    %132 = vmatpush.msra.mxu0 %v127
    %133 = vmatpush.msra.mxu0 %v126
    %134 = vmatpush.msra.mxu0 %v125
    %135 = vmatpush.msra.mxu0 %v124
    %136 = vmatpush.msra.mxu0 %v123
    %137 = vmatpush.msra.mxu0 %v122
    %138 = vmatpush.msra.mxu0 %v121
    %139 = vmatpush.msra.mxu0 %v120
    %140 = vmatpush.msra.mxu0 %v119
    %141 = vmatpush.msra.mxu0 %v118
    %142 = vmatpush.msra.mxu0 %v117
    %143 = vmatpush.msra.mxu0 %v116
    %144 = vmatpush.msra.mxu0 %v115
    %145 = vmatpush.msra.mxu0 %v114
    %146 = vmatmul.f32.gmra.mxu0 %v113
    %v147 = vpop.f32.mrf.mxu0
    %v148 = vadd.f32 0.0, %v147
    %149 = vdwg.mxu0
    %v150 = vmax.f32 %v148, 0.0
    %v151 = vld [vmem:[#allocation8] sm:$0xff]
    %v152 = vld [vmem:[#allocation8 + $0x8] sm:$0xff]
    %v153 = vld [vmem:[#allocation8 + $0x10] sm:$0xff]
    %v154 = vld [vmem:[#allocation8 + $0x18] sm:$0xff]
    %v155 = vld [vmem:[#allocation8 + $0x20] sm:$0xff]
    %v156 = vld [vmem:[#allocation8 + $0x28] sm:$0xff]
    %v157 = vld [vmem:[#allocation8 + $0x30] sm:$0xff]
    %v158 = vld [vmem:[#allocation8 + $0x38] sm:$0xff]
    %v159 = vld [vmem:[#allocation8 + $0x40] sm:$0xff]
    %v160 = vld [vmem:[#allocation8 + $0x48] sm:$0xff]
    %v161 = vld [vmem:[#allocation8 + $0x50] sm:$0xff]
    %v162 = vld [vmem:[#allocation8 + $0x58] sm:$0xff]
    %v163 = vld [vmem:[#allocation8 + $0x60] sm:$0xff]
    %v164 = vld [vmem:[#allocation8 + $0x68] sm:$0xff]
    %v165 = vld [vmem:[#allocation8 + $0x70] sm:$0xff]
    %v166 = vld [vmem:[#allocation8 + $0x78] sm:$0xff]
    %v167 = vld [vmem:[#allocation8 + $0x80] sm:$0xff]
    %v168 = vld [vmem:[#allocation8 + $0x88] sm:$0xff]
    %v169 = vld [vmem:[#allocation8 + $0x90] sm:$0xff]
    %v170 = vld [vmem:[#allocation8 + $0x98] sm:$0xff]
    %v171 = vld [vmem:[#allocation8 + $0xa0] sm:$0xff]
    %v172 = vld [vmem:[#allocation8 + $0xa8] sm:$0xff]
    %v173 = vld [vmem:[#allocation8 + $0xb0] sm:$0xff]
    %v174 = vld [vmem:[#allocation8 + $0xb8] sm:$0xff]
    %v175 = vld [vmem:[#allocation8 + $0xc0] sm:$0xff]
    %v176 = vld [vmem:[#allocation8 + $0xc8] sm:$0xff]
    %v177 = vld [vmem:[#allocation8 + $0xd0] sm:$0xff]
    %v178 = vld [vmem:[#allocation8 + $0xd8] sm:$0xff]
    %v179 = vld [vmem:[#allocation8 + $0xe0] sm:$0xff]
    %v180 = vld [vmem:[#allocation8 + $0xe8] sm:$0xff]
    %v181 = vld [vmem:[#allocation8 + $0xf0] sm:$0xff]
    %v182 = vld [vmem:[#allocation8 + $0xf8] sm:$0xff]
    %v183 = vld [vmem:[#allocation8 + $0x100] sm:$0xff]
    %v184 = vld [vmem:[#allocation8 + $0x108] sm:$0xff]
    %v185 = vld [vmem:[#allocation8 + $0x110] sm:$0xff]
    %v186 = vld [vmem:[#allocation8 + $0x118] sm:$0xff]
    %v187 = vld [vmem:[#allocation8 + $0x120] sm:$0xff]
    %v188 = vld [vmem:[#allocation8 + $0x128] sm:$0xff]
    %v189 = vld [vmem:[#allocation8 + $0x130] sm:$0xff]
    %v190 = vld [vmem:[#allocation8 + $0x138] sm:$0xff]
    %v191 = vld [vmem:[#allocation8 + $0x140] sm:$0xff]
    %v192 = vld [vmem:[#allocation8 + $0x148] sm:$0xff]
    %v193 = vld [vmem:[#allocation8 + $0x150] sm:$0xff]
    %v194 = vld [vmem:[#allocation8 + $0x158] sm:$0xff]
    %v195 = vld [vmem:[#allocation8 + $0x160] sm:$0xff]
    %v196 = vld [vmem:[#allocation8 + $0x168] sm:$0xff]
    %v197 = vld [vmem:[#allocation8 + $0x170] sm:$0xff]
    %v198 = vld [vmem:[#allocation8 + $0x178] sm:$0xff]
    %v199 = vld [vmem:[%s5] sm:$0x7]
    %v201 = vperm.slane %v199, 0
    %v202 = vperm.slane %v199, 1
    %v203 = vperm.slane %v199, 2
    %207 = vmatpush.msra.mxu0 %v196
    %208 = vmatpush.msra.mxu0 %v193
    %209 = vmatpush.msra.mxu0 %v190
    %210 = vmatpush.msra.mxu0 %v187
    %211 = vmatpush.msra.mxu0 %v184
    %212 = vmatpush.msra.mxu0 %v181
    %213 = vmatpush.msra.mxu0 %v178
    %214 = vmatpush.msra.mxu0 %v175
    %215 = vmatpush.msra.mxu0 %v172
    %216 = vmatpush.msra.mxu0 %v169
    %217 = vmatpush.msra.mxu0 %v166
    %218 = vmatpush.msra.mxu0 %v163
    %219 = vmatpush.msra.mxu0 %v160
    %220 = vmatpush.msra.mxu0 %v157
    %221 = vmatpush.msra.mxu0 %v154
    %222 = vmatpush.msra.mxu0 %v151
    %223 = vmatmul.f32.gmra.mxu0 %v150
    %v224 = vpop.f32.mrf.mxu0
    %v225 = vadd.f32 %v201, %v224
    %226 = vdwg.mxu0
    %227 = vmatpush.msra.mxu0 %v197
    %228 = vmatpush.msra.mxu0 %v194
    %229 = vmatpush.msra.mxu0 %v191
    %230 = vmatpush.msra.mxu0 %v188
    %231 = vmatpush.msra.mxu0 %v185
    %232 = vmatpush.msra.mxu0 %v182
    %233 = vmatpush.msra.mxu0 %v179
    %234 = vmatpush.msra.mxu0 %v176
    %235 = vmatpush.msra.mxu0 %v173
    %236 = vmatpush.msra.mxu0 %v170
    %237 = vmatpush.msra.mxu0 %v167
    %238 = vmatpush.msra.mxu0 %v164
    %239 = vmatpush.msra.mxu0 %v161
    %240 = vmatpush.msra.mxu0 %v158
    %241 = vmatpush.msra.mxu0 %v155
    %242 = vmatpush.msra.mxu0 %v152
    %243 = vmatmul.f32.gmra.mxu0 %v150
    %v244 = vpop.f32.mrf.mxu0
    %v245 = vadd.f32 %v202, %v244
    %246 = vdwg.mxu0
    %247 = vmatpush.msra.mxu0 %v198
    %248 = vmatpush.msra.mxu0 %v195
    %249 = vmatpush.msra.mxu0 %v192
    %250 = vmatpush.msra.mxu0 %v189
    %251 = vmatpush.msra.mxu0 %v186
    %252 = vmatpush.msra.mxu0 %v183
    %253 = vmatpush.msra.mxu0 %v180
    %254 = vmatpush.msra.mxu0 %v177
    %255 = vmatpush.msra.mxu0 %v174
    %256 = vmatpush.msra.mxu0 %v171
    %257 = vmatpush.msra.mxu0 %v168
    %258 = vmatpush.msra.mxu0 %v165
    %259 = vmatpush.msra.mxu0 %v162
    %260 = vmatpush.msra.mxu0 %v159
    %261 = vmatpush.msra.mxu0 %v156
    %262 = vmatpush.msra.mxu0 %v153
    %263 = vmatmul.f32.gmra.mxu0 %v150
    %v264 = vpop.f32.mrf.mxu0
    %v265 = vadd.f32 %v203, %v264
    %266 = vdwg.mxu0
    %267 = vst [vmem:[#allocation3] sm:$0xff] %v225
    %268 = vst [vmem:[#allocation3 + $0x8] sm:$0xff] %v245
    %269 = vst [vmem:[#allocation3 + $0x10] sm:$0xff] %v265
    %270 = vst [vmem:[#allocation4] sm:$0xff] 0.0
    %v271 = vld [vmem:[#allocation10] sm:$0xff]
    %v272 = vld [vmem:[#allocation10 + $0x8] sm:$0xff]
    %v273 = vld [vmem:[#allocation10 + $0x10] sm:$0xff]
    %v274 = vld [vmem:[#allocation10 + $0x18] sm:$0xff]
    %v275 = vld [vmem:[#allocation10 + $0x20] sm:$0xff]
    %v276 = vld [vmem:[#allocation10 + $0x28] sm:$0xff]
    %v277 = vld [vmem:[#allocation10 + $0x30] sm:$0xff]
    %v278 = vld [vmem:[#allocation10 + $0x38] sm:$0xff]
    %v279 = vld [vmem:[#allocation10 + $0x40] sm:$0xff]
    %v280 = vld [vmem:[#allocation10 + $0x48] sm:$0xff]
    %v281 = vld [vmem:[#allocation10 + $0x50] sm:$0xff]
    %v282 = vld [vmem:[#allocation10 + $0x58] sm:$0xff]
    %v283 = vld [vmem:[#allocation10 + $0x60] sm:$0xff]
    %v284 = vld [vmem:[#allocation10 + $0x68] sm:$0xff]
    %v285 = vld [vmem:[#allocation10 + $0x70] sm:$0xff]
    %v286 = vld [vmem:[#allocation10 + $0x78] sm:$0xff]
    %v287 = vld [vmem:[#allocation10 + $0x80] sm:$0xff]
    %v288 = vld [vmem:[#allocation10 + $0x88] sm:$0xff]
    %v289 = vld [vmem:[#allocation10 + $0x90] sm:$0xff]
    %v290 = vld [vmem:[#allocation10 + $0x98] sm:$0xff]
    %v291 = vld [vmem:[#allocation10 + $0xa0] sm:$0xff]
    %v292 = vld [vmem:[#allocation10 + $0xa8] sm:$0xff]
    %v293 = vld [vmem:[#allocation10 + $0xb0] sm:$0xff]
    %v294 = vld [vmem:[#allocation10 + $0xb8] sm:$0xff]
    %v295 = vld [vmem:[#allocation10 + $0xc0] sm:$0xff]
    %v296 = vld [vmem:[#allocation10 + $0xc8] sm:$0xff]
    %v297 = vld [vmem:[#allocation10 + $0xd0] sm:$0xff]
    %v298 = vld [vmem:[#allocation10 + $0xd8] sm:$0xff]
    %v299 = vld [vmem:[#allocation10 + $0xe0] sm:$0xff]
    %v300 = vld [vmem:[#allocation10 + $0xe8] sm:$0xff]
    %v301 = vld [vmem:[#allocation10 + $0xf0] sm:$0xff]
    %v302 = vld [vmem:[#allocation10 + $0xf8] sm:$0xff]
    %v303 = vld [vmem:[#allocation10 + $0x100] sm:$0xff]
    %v304 = vld [vmem:[#allocation10 + $0x108] sm:$0xff]
    %v305 = vld [vmem:[#allocation10 + $0x110] sm:$0xff]
    %v306 = vld [vmem:[#allocation10 + $0x118] sm:$0xff]
    %v307 = vld [vmem:[#allocation10 + $0x120] sm:$0xff]
    %v308 = vld [vmem:[#allocation10 + $0x128] sm:$0xff]
    %v309 = vld [vmem:[#allocation10 + $0x130] sm:$0xff]
    %v310 = vld [vmem:[#allocation10 + $0x138] sm:$0xff]
    %v311 = vld [vmem:[#allocation10 + $0x140] sm:$0xff]
    %v312 = vld [vmem:[#allocation10 + $0x148] sm:$0xff]
    %v313 = vld [vmem:[#allocation10 + $0x150] sm:$0xff]
    %v314 = vld [vmem:[#allocation10 + $0x158] sm:$0xff]
    %v315 = vld [vmem:[#allocation10 + $0x160] sm:$0xff]
    %v316 = vld [vmem:[#allocation10 + $0x168] sm:$0xff]
    %v317 = vld [vmem:[#allocation10 + $0x170] sm:$0xff]
    %v318 = vld [vmem:[#allocation10 + $0x178] sm:$0xff]
    %v319 = vld [vmem:[%s6] sm:$0x7]
    %s320 = smul.u32 0, 8
    %s321 = ssub.s32 8, %s320
    %p322 = scmp.lt.s32.totalorder %s321, 8
    %s323 = scalar_select %p322, %s321, 8
    %v324 = vld [vmem:[#allocation2] sm:$0x1]
    // While loop
    $region58: #{tpu_custom_call.1} parent=1 // loop_pre_header
      _
    $region59: #{tpu_custom_call.1} parent=1 // loop_header
      %s326 = sphi 0, %s328
      %p327 = scmp.ge.s32.totalorder %s326, %s323
      %v331 = vphi %v324, %v459
    $region60: #{tpu_custom_call.1} parent=1 // loop_header_branch
      %330 = sbr.rel (%p327) target = $region64
    $region61: #{tpu_custom_call.1} parent=1 // loop_body
      %s332 = sshra.s32 %s326, 3
      %s333 = sand.u32 %s326, 7
      %s334 = sshra.s32 %s326, 3
      %s335 = sand.u32 %s326, 7
      %s336 = smul.u32 %s332, 3
      %s337 = smul.u32 %s336, 8
      %s338 = sadd.s32 %s337, %s335
      %s339 = scalar_lea.vmem [#allocation3], %s338
      %v340 = vld [vmem:[%s339] ss:$8 sm:$0x7]
      %v342 = vperm.slane %v319, 0
      %v343 = vperm.slane %v319, 1
      %v344 = vperm.slane %v319, 2
      %348 = vmatpush.msra.mxu0 %v316
      %349 = vmatpush.msra.mxu0 %v313
      %350 = vmatpush.msra.mxu0 %v310
      %351 = vmatpush.msra.mxu0 %v307
      %352 = vmatpush.msra.mxu0 %v304
      %353 = vmatpush.msra.mxu0 %v301
      %354 = vmatpush.msra.mxu0 %v298
      %355 = vmatpush.msra.mxu0 %v295
      %356 = vmatpush.msra.mxu0 %v292
      %357 = vmatpush.msra.mxu0 %v289
      %358 = vmatpush.msra.mxu0 %v286
      %359 = vmatpush.msra.mxu0 %v283
      %360 = vmatpush.msra.mxu0 %v280
      %361 = vmatpush.msra.mxu0 %v277
      %362 = vmatpush.msra.mxu0 %v274
      %363 = vmatpush.msra.mxu0 %v271
      %364 = vmatmul.f32.gmra.mxu0 %v331
      %v365 = vpop.f32.mrf.mxu0
      %v366 = vadd.f32 %v342, %v365
      %367 = vdwg.mxu0
      %368 = vmatpush.msra.mxu0 %v317
      %369 = vmatpush.msra.mxu0 %v314
      %370 = vmatpush.msra.mxu0 %v311
      %371 = vmatpush.msra.mxu0 %v308
      %372 = vmatpush.msra.mxu0 %v305
      %373 = vmatpush.msra.mxu0 %v302
      %374 = vmatpush.msra.mxu0 %v299
      %375 = vmatpush.msra.mxu0 %v296
      %376 = vmatpush.msra.mxu0 %v293
      %377 = vmatpush.msra.mxu0 %v290
      %378 = vmatpush.msra.mxu0 %v287
      %379 = vmatpush.msra.mxu0 %v284
      %380 = vmatpush.msra.mxu0 %v281
      %381 = vmatpush.msra.mxu0 %v278
      %382 = vmatpush.msra.mxu0 %v275
      %383 = vmatpush.msra.mxu0 %v272
      %384 = vmatmul.f32.gmra.mxu0 %v331
      %v385 = vpop.f32.mrf.mxu0
      %v386 = vadd.f32 %v343, %v385
      %387 = vdwg.mxu0
      %388 = vmatpush.msra.mxu0 %v318
      %389 = vmatpush.msra.mxu0 %v315
      %390 = vmatpush.msra.mxu0 %v312
      %391 = vmatpush.msra.mxu0 %v309
      %392 = vmatpush.msra.mxu0 %v306
      %393 = vmatpush.msra.mxu0 %v303
      %394 = vmatpush.msra.mxu0 %v300
      %395 = vmatpush.msra.mxu0 %v297
      %396 = vmatpush.msra.mxu0 %v294
      %397 = vmatpush.msra.mxu0 %v291
      %398 = vmatpush.msra.mxu0 %v288
      %399 = vmatpush.msra.mxu0 %v285
      %400 = vmatpush.msra.mxu0 %v282
      %401 = vmatpush.msra.mxu0 %v279
      %402 = vmatpush.msra.mxu0 %v276
      %403 = vmatpush.msra.mxu0 %v273
      %404 = vmatmul.f32.gmra.mxu0 %v331
      %v405 = vpop.f32.mrf.mxu0
      %v406 = vadd.f32 %v344, %v405
      %407 = vdwg.mxu0
      %v408 = vadd.f32 %v340, %v366
      %v409 = vxor.u32 %v408, 2147483648
      %v410 = vmul.f32 %v409, 1.442695
      %v411 = vpow.pop %v410
      %v412 = vadd.f32 %v411, 1.0
      %v413 = vrcp.pop %v412
      %v414 = vmul.f32 %v412, %v413
      %v415 = vsub.f32 1.0, %v414
      %v416 = vmul.f32 %v413, %v415
      %v417 = vadd.f32 %v413, %v416
      %vm418 = vweird.f32 %v412
      %vm419 = vweird.f32 %v413
      %vm420 = vmor %vm418, %vm419
      %v421 = vsel %vm420, %v413, %v417
      %v422 = vand.u32 2147483647, %v412
      %vm423 = vcmp.eq.f32.partialorder %v422, 8.507059e+37
      %v424 = vand.u32 %v412, 2147483648
      %v425 = vor.u32 1.1754944e-38, %v424
      %v426 = vsel %vm423, %v425, %v421
      %v427 = vmul.f32 1.0, %v426
      %v429 = vrot.slane %v340, 1
      %v431 = vadd.f32 %v429, %v386
      %v432 = vxor.u32 %v431, 2147483648
      %v433 = vmul.f32 %v432, 1.442695
      %v434 = vpow.pop %v433
      %v435 = vadd.f32 %v434, 1.0
      %v436 = vrcp.pop %v435
      %v437 = vmul.f32 %v435, %v436
      %v438 = vsub.f32 1.0, %v437
      %v439 = vmul.f32 %v436, %v438
      %v440 = vadd.f32 %v436, %v439
      %vm441 = vweird.f32 %v435
      %vm442 = vweird.f32 %v436
      %vm443 = vmor %vm441, %vm442
      %v444 = vsel %vm443, %v436, %v440
      %v445 = vand.u32 2147483647, %v435
      %vm446 = vcmp.eq.f32.partialorder %v445, 8.507059e+37
      %v447 = vand.u32 %v435, 2147483648
      %v448 = vor.u32 1.1754944e-38, %v447
      %v449 = vsel %vm446, %v448, %v444
      %v450 = vmul.f32 1.0, %v449
      %v451 = vmul.f32 %v427, %v406
      %v452 = vrot.slane %v340, 2
      %v454 = vadd.f32 %v452, %v451
      %v455 = vtanh.pop %v454
      %v456 = vsub.f32 1.0, %v450
      %v457 = vmul.f32 %v456, %v455
      %v458 = vmul.f32 %v450, %v331
      %v459 = vadd.f32 %v457, %v458
      %s460 = scalar_lea.vmem [#allocation4], %s326
      %461 = vst [vmem:[%s460] sm:$0x1] %v459
    $region62: #{tpu_custom_call.1} parent=1 // loop_footer
      %s328 = sadd.s32 %s326, 1
    $region63: #{tpu_custom_call.1} parent=1 // loop_footer_branch
      %325 = sbr.rel target = $region59
    $region64: #{tpu_custom_call.1} parent=1 // loop_exit
      _
    %462 = vst [vmem:[#allocation2] sm:$0x1] %v331
    %v463 = vld [vmem:[#allocation4] sm:$0xff]
    %v464 = vld [vmem:[#allocation11] sm:$0xff]
    %v465 = vld [vmem:[#allocation11 + $0x8] sm:$0xff]
    %v466 = vld [vmem:[#allocation11 + $0x10] sm:$0xff]
    %v467 = vld [vmem:[#allocation11 + $0x18] sm:$0xff]
    %v468 = vld [vmem:[#allocation11 + $0x20] sm:$0xff]
    %v469 = vld [vmem:[#allocation11 + $0x28] sm:$0xff]
    %v470 = vld [vmem:[#allocation11 + $0x30] sm:$0xff]
    %v471 = vld [vmem:[#allocation11 + $0x38] sm:$0xff]
    %v472 = vld [vmem:[#allocation11 + $0x40] sm:$0xff]
    %v473 = vld [vmem:[#allocation11 + $0x48] sm:$0xff]
    %v474 = vld [vmem:[#allocation11 + $0x50] sm:$0xff]
    %v475 = vld [vmem:[#allocation11 + $0x58] sm:$0xff]
    %v476 = vld [vmem:[#allocation11 + $0x60] sm:$0xff]
    %v477 = vld [vmem:[#allocation11 + $0x68] sm:$0xff]
    %v478 = vld [vmem:[#allocation11 + $0x70] sm:$0xff]
    %v479 = vld [vmem:[#allocation11 + $0x78] sm:$0xff]
    %v480 = vld [vmem:[%s8] sm:$0x1]
    %v482 = vperm.slane %v480, 0
    %484 = vmatpush.msra.mxu0 %v479
    %485 = vmatpush.msra.mxu0 %v478
    %486 = vmatpush.msra.mxu0 %v477
    %487 = vmatpush.msra.mxu0 %v476
    %488 = vmatpush.msra.mxu0 %v475
    %489 = vmatpush.msra.mxu0 %v474
    %490 = vmatpush.msra.mxu0 %v473
    %491 = vmatpush.msra.mxu0 %v472
    %492 = vmatpush.msra.mxu0 %v471
    %493 = vmatpush.msra.mxu0 %v470
    %494 = vmatpush.msra.mxu0 %v469
    %495 = vmatpush.msra.mxu0 %v468
    %496 = vmatpush.msra.mxu0 %v467
    %497 = vmatpush.msra.mxu0 %v466
    %498 = vmatpush.msra.mxu0 %v465
    %499 = vmatpush.msra.mxu0 %v464
    %500 = vmatmul.f32.gmra.mxu0 %v463
    %v501 = vpop.f32.mrf.mxu0
    %v502 = vadd.f32 %v482, %v501
    %503 = vdwg.mxu0
    %504 = vmax.xlane.f32.xlu0 %v502
    %v505 = vpop.xlane.xlu0 %504
    %v506 = vsub.f32 %v502, %v505
    %v507 = vmul.f32 %v506, 1.442695
    %v508 = vpow.pop %v507
    %509 = vadd.xlane.f32.xlu0 %v508
    %v510 = vpop.xlane.xlu0 %509
    %v511 = vlog2.pop %v510
    %v512 = vmul.f32 %v511, 0.6931472
    %v513 = vadd.f32 %v505, %v512
    %v514 = vsub.f32 %v502, %v513
    %515 = vst [vmem:[#allocation13] sm:$0xff] %v514
    // Predicated region
    $region65: #{tpu_custom_call.1} parent=1 // pred_check
      %p516 = pneg %p99
    $region66: #{tpu_custom_call.1} parent=1 // pred_check_branch
      %518 = sbr.rel (%p516) target = $region68
    $region67: #{tpu_custom_call.1} parent=1 // pred_region
      %519 = vst [vmem:[#allocation14] sm:$0x1] %v331
    $region68: #{tpu_custom_call.1} parent=1 // pred_fallthru
      _
    // Predicated region
    $region69: #{tpu_custom_call.1} parent=1 // pred_check
      _
    $region70: #{tpu_custom_call.1} parent=1 // pred_check_branch
      %521 = sbr.rel (0) target = $region72
    $region71: #{tpu_custom_call.1} parent=1 // pred_region
      %523 = vsyncadd [#allocation7], 0
      %s525 = sshll.u32 [#allocation13], 4
      %s526 = int_to_ptr.vmem [resolvable:$true] %s525
      %s527 = sshll.u32 %s9, 4
      %s528 = int_to_ptr.hbm [resolvable:$true] %s527
      %530 = dma.vmem_to_hbm [thread:$0]  %s526, 128, %s528, [#allocation7]
    $region72: #{tpu_custom_call.1} parent=1 // pred_fallthru
      _
    // Predicated region
    $region73: #{tpu_custom_call.1} parent=1 // pred_check
      _
    $region74: #{tpu_custom_call.1} parent=1 // pred_check_branch
      %532 = sbr.rel (0) target = $region76
    $region75: #{tpu_custom_call.1} parent=1 // pred_region
      %534 = vsyncadd [#allocation15], 0
      %s536 = sshll.u32 [#allocation14], 4
      %s537 = int_to_ptr.vmem [resolvable:$true] %s536
      %s538 = sshll.u32 %s10, 4
      %s539 = int_to_ptr.hbm [resolvable:$true] %s538
      %541 = dma.vmem_to_hbm [thread:$0]  %s537, 16, %s539, [#allocation15]
    $region76: #{tpu_custom_call.1} parent=1 // pred_fallthru
      _
    // Predicated region
    $region77: #{tpu_custom_call.1} parent=1 // pred_check
      _
    $region78: #{tpu_custom_call.1} parent=1 // pred_check_branch
      %543 = sbr.rel (0) target = $region80
    $region79: #{tpu_custom_call.1} parent=1 // pred_region
      %545 = dma.done [#allocation7], 128
    $region80: #{tpu_custom_call.1} parent=1 // pred_fallthru
      _
    // Predicated region
    $region81: #{tpu_custom_call.1} parent=1 // pred_check
      _
    $region82: #{tpu_custom_call.1} parent=1 // pred_check_branch
      %547 = sbr.rel (0) target = $region84
    $region83: #{tpu_custom_call.1} parent=1 // pred_region
      %549 = dma.done [#allocation15], 16
    $region84: #{tpu_custom_call.1} parent=1 // pred_fallthru
      _
    %550 = vsyncpa [#allocation6], 1
    %551 = vsyncpa [#allocation9], 1
    %552 = vsyncpa [#allocation12], 1
    %553 = vsyncpa [#allocation7], 1
    %554 = vsyncpa [#allocation15], 1

</llo_original>
